<compile_context>
chip_gen: v6e
topology: v6e:2x2x1
jax: 0.10.0
libtpu: 0.0.40
codegen_flags: <defaults>
</compile_context>

<pallas_src>
import functools

import jax
import jax.numpy as jnp
from jax import lax
from jax.experimental import pallas as pl
from jax.experimental.pallas import tpu as pltpu

_BIG = 1e30      # finite sentinel distance for masked-out pairs
_CHUNK = 8       # candidate rows per inner pass (one sublane group / vreg)


def _round_up(a, b):
    return (a + b - 1) // b * b


def _triplet_loss_kernel(x_ref, lab_row_ref, lab_col_ref, acc_ref, cnt_ref,
                         pos_scr, neg_scr, *, margin, squared, n, tm, n_pad,
                         l2_norm):
    i = pl.program_id(0)
    start = pl.multiple_of(i * tm, 8)

    xf = x_ref[...]                           # (Np, D) all embeddings (pad rows = 0)
    xa = x_ref[pl.ds(start, tm), :]           # (tm, D) this block's anchors
    d = xf.shape[1]

    if l2_norm:
        sq_f = jnp.sum(xf * xf, axis=1, keepdims=True)                # (Np, 1)
        sq_a = jnp.sum(xa * xa, axis=1, keepdims=True)                # (tm, 1)
        xf = xf * lax.rsqrt(jnp.maximum(sq_f, 1e-24))
        xa = xa * lax.rsqrt(jnp.maximum(sq_a, 1e-24))
        sq_f_col = jnp.ones((n_pad, 1), jnp.float32)
        sq_a_row = jnp.ones((1, tm), jnp.float32)
    else:
        sq_f_col = jnp.sum(xf * xf, axis=1, keepdims=True)            # (Np, 1)
        # (1, tm) anchor squared-norm row via a tiny MXU matmul: avoids a
        # cross-lane transpose of the (tm, 1) column.
        sq_a_row = lax.dot_general(
            jnp.ones((1, d), jnp.float32), xa * xa,
            (((1,), (1,)), ((), ())), preferred_element_type=jnp.float32)

    # mat[c, a] = ||x_c - x_a|| (or squared): candidates x anchors slab via MXU.
    gram = lax.dot_general(xf, xa, (((1,), (1,)), ((), ())),
                           preferred_element_type=jnp.float32)        # (Np, tm)
    d2 = jnp.maximum(sq_f_col + sq_a_row - 2.0 * gram, 0.0)
    mat = d2 if squared else jnp.sqrt(d2)

    # ---- "all"-miner validity masks, folded into the slab once --------------
    lab_a = lab_row_ref[...]                                          # (1, tm)
    lab_c = lab_col_ref[...]                                          # (Np, 1)
    same = lab_c == lab_a                                             # (Np, tm)
    cand_ids = lax.broadcasted_iota(jnp.int32, (n_pad, tm), 0)
    anc_ids = start + lax.broadcasted_iota(jnp.int32, (n_pad, tm), 1)
    cand_valid = cand_ids < n
    anc_valid = anc_ids < n
    pos_ok = same & (cand_ids != anc_ids) & cand_valid & anc_valid
    neg_ok = (~same) & cand_valid

    pos_scr[...] = jnp.where(pos_ok, mat + margin, -_BIG)   # d_ap + margin (masked)
    neg_scr[...] = jnp.where(neg_ok, mat, _BIG)             # d_an          (masked)

    n_chunks = _round_up(n, _CHUNK) // _CHUNK

    def outer(c, carry):
        a_tot, c_tot = carry                                 # (1,1) f32 / (1,1) i32
        r0 = pl.multiple_of(c * _CHUNK, _CHUNK)
        posv_c = pos_scr[pl.ds(r0, _CHUNK), :]               # (CH, tm) loop-invariant

        def inner(j, ic):
            acc_c, cnt_c = ic
            d_an = neg_scr[pl.ds(j, 1), :]                   # (1, tm) negative row j
            viol = posv_c - d_an                             # (CH, tm)
            mined = jnp.where(viol >= 0.0, 1.0, 0.0)         # masked pairs never mine
            return acc_c + viol * mined, cnt_c + mined

        acc_c, cnt_c = lax.fori_loop(
            0, n, inner,
            (jnp.zeros((_CHUNK, tm), jnp.float32),
             jnp.zeros((_CHUNK, tm), jnp.float32)),
            unroll=min(8, n))

        a_tot = a_tot + jnp.sum(acc_c, keepdims=True)
        c_tot = c_tot + jnp.sum(cnt_c, keepdims=True).astype(jnp.int32)
        return a_tot, c_tot

    a_tot, c_tot = lax.fori_loop(
        0, n_chunks, outer,
        (jnp.zeros((1, 1), jnp.float32), jnp.zeros((1, 1), jnp.int32)))

    acc_ref[...] = a_tot.reshape(1, 1, 1)
    cnt_ref[...] = c_tot.reshape(1, 1, 1)


def triplet_margin_loss(embeddings, labels, *, margin=0.2,
                        type_of_distance="euclidean",
                        l2_normalization=False, need_cnt=True,
                        block_anchors=128):
    """Pallas forward of TripletMarginLoss. Returns (loss, n_triplets) or loss."""
    x = jnp.asarray(embeddings, jnp.float32)
    n, d = x.shape
    labels = jnp.asarray(labels, jnp.int32).reshape(n)
    squared = type_of_distance in ("sq_euclidean", "squared_euclidean")

    # Anchor-block size: one block for small batches; 128-lane blocks otherwise
    # (multiple of 128 keeps the label-row block lane-aligned, feeds the MXU,
    # and bounds per-step VMEM to O(Np * 128) on all generations).
    if n <= 256:
        n_pad = max(_round_up(n, 8), 8)
        tm = n_pad
    else:
        tm = block_anchors
        n_pad = _round_up(n, tm)
    grid = n_pad // tm

    x_pad = jnp.zeros((n_pad, d), jnp.float32).at[:n].set(x)
    lab_pad = jnp.full((n_pad,), -1, jnp.int32).at[:n].set(labels)
    lab_row = lab_pad.reshape(1, n_pad)
    lab_col = lab_pad.reshape(n_pad, 1)

    kernel = functools.partial(_triplet_loss_kernel, margin=float(margin),
                               squared=squared, n=n, tm=tm, n_pad=n_pad,
                               l2_norm=bool(l2_normalization))

    # VMEM budget: double-buffered x + two (Np, tm) scratch slabs + slack.
    vmem_needed = 2 * n_pad * d * 4 + 2 * n_pad * tm * 4 + (2 << 20)
    vmem_limit = int(min(max(vmem_needed, 16 << 20), 64 << 20))

    acc_p, cnt_p = pl.pallas_call(
        kernel,
        out_shape=(jax.ShapeDtypeStruct((grid, 1, 1), jnp.float32),
                   jax.ShapeDtypeStruct((grid, 1, 1), jnp.int32)),
        grid=(grid,),
        in_specs=[
            pl.BlockSpec((n_pad, d), lambda i: (0, 0)),   # all embeddings (VMEM-resident)
            pl.BlockSpec((1, tm), lambda i: (0, i)),      # anchor labels (row block)
            pl.BlockSpec((n_pad, 1), lambda i: (0, 0)),   # all labels (column)
        ],
        out_specs=(pl.BlockSpec((1, 1, 1), lambda i: (i, 0, 0)),
                   pl.BlockSpec((1, 1, 1), lambda i: (i, 0, 0))),
        scratch_shapes=[pltpu.VMEM((n_pad, tm), jnp.float32),   # pos view (+margin)
                        pltpu.VMEM((n_pad, tm), jnp.float32)],  # neg view
        compiler_params=pltpu.CompilerParams(
            dimension_semantics=("parallel",),
            vmem_limit_bytes=vmem_limit),
    )(x_pad, lab_row, lab_col)

    total = jnp.sum(acc_p)
    cnt = jnp.sum(cnt_p)
    loss = jnp.where(cnt > 0,
                     total / jnp.maximum(cnt.astype(jnp.float32), 1.0),
                     0.0)
    return (loss, cnt) if need_cnt else loss


def _reference(embeddings, labels, margin=0.2, squared=False):
    """Pure-JAX reference of the same semantics, for a sanity check."""
    x = embeddings.astype(jnp.float32)
    d2 = jnp.sum((x[:, None, :] - x[None, :, :]) ** 2, axis=-1)
    mat = d2 if squared else jnp.sqrt(jnp.maximum(d2, 0.0))
    n = x.shape[0]
    same = labels[:, None] == labels[None, :]
    eye = jnp.eye(n, dtype=bool)
    pos = same & ~eye
    neg = ~same
    viol = mat[:, :, None] - mat[:, None, :] + margin                 # (a, p, n)
    valid = pos[:, :, None] & neg[:, None, :]
    mined = valid & (viol >= 0.0)
    cnt = jnp.sum(mined)
    s = jnp.sum(jnp.where(mined, jnp.maximum(viol, 0.0), 0.0))
    loss = jnp.where(cnt > 0, s / jnp.maximum(cnt, 1), 0.0)
    return loss, cnt


if __name__ == "__main__":
    key = jax.random.PRNGKey(0)

    # Test 1: small balanced batch.
    N, D = 8, 32
    embeddings = jax.random.normal(key, (N, D), dtype=jnp.float32)
    labels = jnp.array([0, 0, 1, 1, 2, 2, 3, 3], dtype=jnp.int32)
    loss, n_triplets = triplet_margin_loss(
        embeddings, labels, margin=0.2,
        type_of_distance="euclidean", l2_normalization=False, need_cnt=True)
    loss = jax.block_until_ready(loss)
    n_triplets = jax.block_until_ready(n_triplets)
    ref_loss, ref_cnt = _reference(embeddings, labels, margin=0.2, squared=False)
    assert int(n_triplets) == int(ref_cnt), (int(n_triplets), int(ref_cnt))
    assert jnp.allclose(loss, ref_loss, atol=1e-4, rtol=1e-4), (loss, ref_loss)

    # Test 2: non-multiple-of-8 batch (exercises padding masks) + squared dist.
    key2 = jax.random.PRNGKey(1)
    N2, D2 = 12, 16
    emb2 = jax.random.normal(key2, (N2, D2), dtype=jnp.float32)
    lab2 = jnp.array([0, 0, 0, 1, 1, 1, 1, 2, 2, 2, 2, 2], dtype=jnp.int32)
    loss2, cnt2 = triplet_margin_loss(
        emb2, lab2, margin=0.3, type_of_distance="sq_euclidean",
        l2_normalization=False, need_cnt=True)
    loss2 = jax.block_until_ready(loss2)
    cnt2 = jax.block_until_ready(cnt2)
    ref_loss2, ref_cnt2 = _reference(emb2, lab2, margin=0.3, squared=True)
    assert int(cnt2) == int(ref_cnt2), (int(cnt2), int(ref_cnt2))
    assert jnp.allclose(loss2, ref_loss2, atol=1e-4, rtol=1e-4), (loss2, ref_loss2)

    print("KERNEL_OK")
</pallas_src>

<mosaic_0001>
module attributes {stable_mosaic.version = 11 : i64} {
  func.func @_triplet_loss_kernel(%arg0: i32, %arg1: memref<8x32xf32, #tpu.memory_space<vmem>>, %arg2: memref<1x8xi32, #tpu.memory_space<vmem>>, %arg3: memref<8x1xi32, #tpu.memory_space<vmem>>, %arg4: memref<1x1x1xf32, #tpu.memory_space<vmem>>, %arg5: memref<1x1x1xi32, #tpu.memory_space<vmem>>, %arg6: memref<8x8xf32, #tpu.memory_space<vmem>>, %arg7: memref<8x8xf32, #tpu.memory_space<vmem>>) attributes {dimension_semantics = [#tpu.dimension_semantics<parallel>], iteration_bounds = array<i64: 1>, scalar_prefetch = 0 : i64, scratch_operands = 2 : i64, tpu.core_type = #tpu.core_type<tc>, window_params = [{pipeline_mode = #tpu.pipeline_mode<synchronous>, transform_indices = @transform_0, window_bounds = array<i64: 8, 32>}, {transform_indices = @transform_1, window_bounds = array<i64: 1, 8>}, {pipeline_mode = #tpu.pipeline_mode<synchronous>, transform_indices = @transform_2, window_bounds = array<i64: 8, 1>}, {transform_indices = @transform_3, window_bounds = array<i64: 1, 1, 1>}, {transform_indices = @transform_4, window_bounds = array<i64: 1, 1, 1>}]} {
    %c8_i32 = arith.constant 8 : i32
    %0 = arith.muli %arg0, %c8_i32 : i32
    %1 = tpu.assume_multiple %0, 8 : i32
    %c0 = arith.constant 0 : index
    %c0_0 = arith.constant 0 : index
    %2 = vector.load %arg1[%c0, %c0_0] : memref<8x32xf32, #tpu.memory_space<vmem>>, vector<8x32xf32>
    %3 = arith.index_cast %1 : i32 to index
    %c0_1 = arith.constant 0 : index
    %4 = vector.load %arg1[%3, %c0_1] : memref<8x32xf32, #tpu.memory_space<vmem>>, vector<8x32xf32>
    %5 = arith.mulf %2, %2 : vector<8x32xf32>
    %cst = arith.constant dense<0.000000e+00> : vector<8xf32>
    %6 = vector.multi_reduction <add>, %5, %cst [1] : vector<8x32xf32> to vector<8xf32>
    %7 = vector.shape_cast %6 : vector<8xf32> to vector<8x1xf32>
    %cst_2 = arith.constant 1.000000e+00 : f32
    %8 = vector.broadcast %cst_2 : f32 to vector<1x32xf32>
    %9 = arith.mulf %4, %4 : vector<8x32xf32>
    %cst_3 = arith.constant dense<0.000000e+00> : vector<1x8xf32>
    %10 = tpu.matmul %8, %9, %cst_3 {dimension_numbers = #tpu.dot_dimension_numbers<[1], [1], [0], [0], [0, 0, 1, 0], [], []>} : vector<1x32xf32>, vector<8x32xf32>, vector<1x8xf32> -> vector<1x8xf32>
    %cst_4 = arith.constant dense<0.000000e+00> : vector<8x8xf32>
    %11 = tpu.matmul %2, %4, %cst_4 {dimension_numbers = #tpu.dot_dimension_numbers<[1], [1], [0], [0], [0, 0, 1, 0], [], []>} : vector<8x32xf32>, vector<8x32xf32>, vector<8x8xf32> -> vector<8x8xf32>
    %12 = vector.broadcast %7 : vector<8x1xf32> to vector<8x8xf32>
    %13 = vector.broadcast %10 : vector<1x8xf32> to vector<8x8xf32>
    %14 = arith.addf %12, %13 : vector<8x8xf32>
    %cst_5 = arith.constant 2.000000e+00 : f32
    %15 = vector.broadcast %cst_5 : f32 to vector<8x8xf32>
    %16 = arith.mulf %15, %11 : vector<8x8xf32>
    %17 = arith.subf %14, %16 : vector<8x8xf32>
    %cst_6 = arith.constant 0.000000e+00 : f32
    %18 = vector.broadcast %cst_6 : f32 to vector<8x8xf32>
    %19 = arith.maximumf %17, %18 : vector<8x8xf32>
    %20 = math.sqrt %19 : vector<8x8xf32>
    %c0_7 = arith.constant 0 : index
    %c0_8 = arith.constant 0 : index
    %21 = vector.load %arg2[%c0_7, %c0_8] : memref<1x8xi32, #tpu.memory_space<vmem>>, vector<1x8xi32>
    %c0_9 = arith.constant 0 : index
    %c0_10 = arith.constant 0 : index
    %22 = vector.load %arg3[%c0_9, %c0_10] : memref<8x1xi32, #tpu.memory_space<vmem>>, vector<8x1xi32>
    %23 = vector.broadcast %22 : vector<8x1xi32> to vector<8x8xi32>
    %24 = vector.broadcast %21 : vector<1x8xi32> to vector<8x8xi32>
    %25 = arith.cmpi eq, %23, %24 : vector<8x8xi32>
    %26 = tpu.iota {dimensions = array<i32: 0>} : vector<8x8xi32>
    %27 = tpu.iota {dimensions = array<i32: 1>} : vector<8x8xi32>
    %28 = vector.broadcast %1 : i32 to vector<8x8xi32>
    %29 = arith.addi %28, %27 : vector<8x8xi32>
    %c8_i32_11 = arith.constant 8 : i32
    %30 = vector.broadcast %c8_i32_11 : i32 to vector<8x8xi32>
    %31 = arith.cmpi slt, %26, %30 : vector<8x8xi32>
    %c8_i32_12 = arith.constant 8 : i32
    %32 = vector.broadcast %c8_i32_12 : i32 to vector<8x8xi32>
    %33 = arith.cmpi slt, %29, %32 : vector<8x8xi32>
    %34 = arith.cmpi ne, %26, %29 : vector<8x8xi32>
    %35 = arith.andi %25, %34 : vector<8x8xi1>
    %36 = arith.andi %35, %31 : vector<8x8xi1>
    %37 = arith.andi %36, %33 : vector<8x8xi1>
    %cst_13 = arith.constant dense<true> : vector<8x8xi1>
    %38 = arith.xori %25, %cst_13 : vector<8x8xi1>
    %39 = arith.andi %38, %31 : vector<8x8xi1>
    %cst_14 = arith.constant 2.000000e-01 : f32
    %40 = vector.broadcast %cst_14 : f32 to vector<8x8xf32>
    %41 = arith.addf %20, %40 : vector<8x8xf32>
    %cst_15 = arith.constant -1.000000e+30 : f32
    %42 = vector.broadcast %cst_15 : f32 to vector<8x8xf32>
    %43 = arith.select %37, %41, %42 : vector<8x8xi1>, vector<8x8xf32>
    %c0_16 = arith.constant 0 : index
    %c0_17 = arith.constant 0 : index
    %44 = vector.load %arg6[%c0_16, %c0_17] : memref<8x8xf32, #tpu.memory_space<vmem>>, vector<8x8xf32>
    tpu.vector_store %arg6[%c0_16, %c0_17], %43 {strides = array<i32>} : memref<8x8xf32, #tpu.memory_space<vmem>>, vector<8x8xf32>,
    %cst_18 = arith.constant 1.000000e+30 : f32
    %45 = vector.broadcast %cst_18 : f32 to vector<8x8xf32>
    %46 = arith.select %39, %20, %45 : vector<8x8xi1>, vector<8x8xf32>
    %c0_19 = arith.constant 0 : index
    %c0_20 = arith.constant 0 : index
    %47 = vector.load %arg7[%c0_19, %c0_20] : memref<8x8xf32, #tpu.memory_space<vmem>>, vector<8x8xf32>
    tpu.vector_store %arg7[%c0_19, %c0_20], %46 {strides = array<i32>} : memref<8x8xf32, #tpu.memory_space<vmem>>, vector<8x8xf32>,
    %cst_21 = arith.constant 0.000000e+00 : f32
    %48 = vector.broadcast %cst_21 : f32 to vector<1x1xf32>
    %c0_i32 = arith.constant 0 : i32
    %49 = vector.broadcast %c0_i32 : i32 to vector<1x1xi32>
    %c0_i32_22 = arith.constant 0 : i32
    %c8_i32_23 = arith.constant 8 : i32
    %50 = arith.muli %c0_i32_22, %c8_i32_23 : i32
    %51 = tpu.assume_multiple %50, 8 : i32
    %52 = arith.index_cast %51 : i32 to index
    %c0_24 = arith.constant 0 : index
    %53 = vector.load %arg6[%52, %c0_24] : memref<8x8xf32, #tpu.memory_space<vmem>>, vector<8x8xf32>
    %cst_25 = arith.constant 0.000000e+00 : f32
    %54 = vector.broadcast %cst_25 : f32 to vector<8x8xf32>
    %cst_26 = arith.constant 0.000000e+00 : f32
    %55 = vector.broadcast %cst_26 : f32 to vector<8x8xf32>
    %c0_i32_27 = arith.constant 0 : i32
    %56 = arith.index_cast %c0_i32_27 : i32 to index
    %c0_28 = arith.constant 0 : index
    %57 = vector.load %arg7[%56, %c0_28] : memref<8x8xf32, #tpu.memory_space<vmem>>, vector<1x8xf32>
    %58 = vector.broadcast %57 : vector<1x8xf32> to vector<8x8xf32>
    %59 = arith.subf %53, %58 : vector<8x8xf32>
    %cst_29 = arith.constant 0.000000e+00 : f32
    %60 = vector.broadcast %cst_29 : f32 to vector<8x8xf32>
    %61 = arith.cmpf oge, %59, %60 : vector<8x8xf32>
    %cst_30 = arith.constant 1.000000e+00 : f32
    %cst_31 = arith.constant 0.000000e+00 : f32
    %62 = vector.broadcast %cst_30 : f32 to vector<8x8xf32>
    %63 = vector.broadcast %cst_31 : f32 to vector<8x8xf32>
    %64 = arith.select %61, %62, %63 : vector<8x8xi1>, vector<8x8xf32>
    %65 = arith.mulf %59, %64 : vector<8x8xf32>
    %66 = arith.addf %54, %65 : vector<8x8xf32>
    %67 = arith.addf %55, %64 : vector<8x8xf32>
    %c1_i32 = arith.constant 1 : i32
    %68 = arith.index_cast %c1_i32 : i32 to index
    %c0_32 = arith.constant 0 : index
    %69 = vector.load %arg7[%68, %c0_32] : memref<8x8xf32, #tpu.memory_space<vmem>>, vector<1x8xf32>
    %70 = vector.broadcast %69 : vector<1x8xf32> to vector<8x8xf32>
    %71 = arith.subf %53, %70 : vector<8x8xf32>
    %cst_33 = arith.constant 0.000000e+00 : f32
    %72 = vector.broadcast %cst_33 : f32 to vector<8x8xf32>
    %73 = arith.cmpf oge, %71, %72 : vector<8x8xf32>
    %cst_34 = arith.constant 1.000000e+00 : f32
    %cst_35 = arith.constant 0.000000e+00 : f32
    %74 = vector.broadcast %cst_34 : f32 to vector<8x8xf32>
    %75 = vector.broadcast %cst_35 : f32 to vector<8x8xf32>
    %76 = arith.select %73, %74, %75 : vector<8x8xi1>, vector<8x8xf32>
    %77 = arith.mulf %71, %76 : vector<8x8xf32>
    %78 = arith.addf %66, %77 : vector<8x8xf32>
    %79 = arith.addf %67, %76 : vector<8x8xf32>
    %c2_i32 = arith.constant 2 : i32
    %80 = arith.index_cast %c2_i32 : i32 to index
    %c0_36 = arith.constant 0 : index
    %81 = vector.load %arg7[%80, %c0_36] : memref<8x8xf32, #tpu.memory_space<vmem>>, vector<1x8xf32>
    %82 = vector.broadcast %81 : vector<1x8xf32> to vector<8x8xf32>
    %83 = arith.subf %53, %82 : vector<8x8xf32>
    %cst_37 = arith.constant 0.000000e+00 : f32
    %84 = vector.broadcast %cst_37 : f32 to vector<8x8xf32>
    %85 = arith.cmpf oge, %83, %84 : vector<8x8xf32>
    %cst_38 = arith.constant 1.000000e+00 : f32
    %cst_39 = arith.constant 0.000000e+00 : f32
    %86 = vector.broadcast %cst_38 : f32 to vector<8x8xf32>
    %87 = vector.broadcast %cst_39 : f32 to vector<8x8xf32>
    %88 = arith.select %85, %86, %87 : vector<8x8xi1>, vector<8x8xf32>
    %89 = arith.mulf %83, %88 : vector<8x8xf32>
    %90 = arith.addf %78, %89 : vector<8x8xf32>
    %91 = arith.addf %79, %88 : vector<8x8xf32>
    %c3_i32 = arith.constant 3 : i32
    %92 = arith.index_cast %c3_i32 : i32 to index
    %c0_40 = arith.constant 0 : index
    %93 = vector.load %arg7[%92, %c0_40] : memref<8x8xf32, #tpu.memory_space<vmem>>, vector<1x8xf32>
    %94 = vector.broadcast %93 : vector<1x8xf32> to vector<8x8xf32>
    %95 = arith.subf %53, %94 : vector<8x8xf32>
    %cst_41 = arith.constant 0.000000e+00 : f32
    %96 = vector.broadcast %cst_41 : f32 to vector<8x8xf32>
    %97 = arith.cmpf oge, %95, %96 : vector<8x8xf32>
    %cst_42 = arith.constant 1.000000e+00 : f32
    %cst_43 = arith.constant 0.000000e+00 : f32
    %98 = vector.broadcast %cst_42 : f32 to vector<8x8xf32>
    %99 = vector.broadcast %cst_43 : f32 to vector<8x8xf32>
    %100 = arith.select %97, %98, %99 : vector<8x8xi1>, vector<8x8xf32>
    %101 = arith.mulf %95, %100 : vector<8x8xf32>
    %102 = arith.addf %90, %101 : vector<8x8xf32>
    %103 = arith.addf %91, %100 : vector<8x8xf32>
    %c4_i32 = arith.constant 4 : i32
    %104 = arith.index_cast %c4_i32 : i32 to index
    %c0_44 = arith.constant 0 : index
    %105 = vector.load %arg7[%104, %c0_44] : memref<8x8xf32, #tpu.memory_space<vmem>>, vector<1x8xf32>
    %106 = vector.broadcast %105 : vector<1x8xf32> to vector<8x8xf32>
    %107 = arith.subf %53, %106 : vector<8x8xf32>
    %cst_45 = arith.constant 0.000000e+00 : f32
    %108 = vector.broadcast %cst_45 : f32 to vector<8x8xf32>
    %109 = arith.cmpf oge, %107, %108 : vector<8x8xf32>
    %cst_46 = arith.constant 1.000000e+00 : f32
    %cst_47 = arith.constant 0.000000e+00 : f32
    %110 = vector.broadcast %cst_46 : f32 to vector<8x8xf32>
    %111 = vector.broadcast %cst_47 : f32 to vector<8x8xf32>
    %112 = arith.select %109, %110, %111 : vector<8x8xi1>, vector<8x8xf32>
    %113 = arith.mulf %107, %112 : vector<8x8xf32>
    %114 = arith.addf %102, %113 : vector<8x8xf32>
    %115 = arith.addf %103, %112 : vector<8x8xf32>
    %c5_i32 = arith.constant 5 : i32
    %116 = arith.index_cast %c5_i32 : i32 to index
    %c0_48 = arith.constant 0 : index
    %117 = vector.load %arg7[%116, %c0_48] : memref<8x8xf32, #tpu.memory_space<vmem>>, vector<1x8xf32>
    %118 = vector.broadcast %117 : vector<1x8xf32> to vector<8x8xf32>
    %119 = arith.subf %53, %118 : vector<8x8xf32>
    %cst_49 = arith.constant 0.000000e+00 : f32
    %120 = vector.broadcast %cst_49 : f32 to vector<8x8xf32>
    %121 = arith.cmpf oge, %119, %120 : vector<8x8xf32>
    %cst_50 = arith.constant 1.000000e+00 : f32
    %cst_51 = arith.constant 0.000000e+00 : f32
    %122 = vector.broadcast %cst_50 : f32 to vector<8x8xf32>
    %123 = vector.broadcast %cst_51 : f32 to vector<8x8xf32>
    %124 = arith.select %121, %122, %123 : vector<8x8xi1>, vector<8x8xf32>
    %125 = arith.mulf %119, %124 : vector<8x8xf32>
    %126 = arith.addf %114, %125 : vector<8x8xf32>
    %127 = arith.addf %115, %124 : vector<8x8xf32>
    %c6_i32 = arith.constant 6 : i32
    %128 = arith.index_cast %c6_i32 : i32 to index
    %c0_52 = arith.constant 0 : index
    %129 = vector.load %arg7[%128, %c0_52] : memref<8x8xf32, #tpu.memory_space<vmem>>, vector<1x8xf32>
    %130 = vector.broadcast %129 : vector<1x8xf32> to vector<8x8xf32>
    %131 = arith.subf %53, %130 : vector<8x8xf32>
    %cst_53 = arith.constant 0.000000e+00 : f32
    %132 = vector.broadcast %cst_53 : f32 to vector<8x8xf32>
    %133 = arith.cmpf oge, %131, %132 : vector<8x8xf32>
    %cst_54 = arith.constant 1.000000e+00 : f32
    %cst_55 = arith.constant 0.000000e+00 : f32
    %134 = vector.broadcast %cst_54 : f32 to vector<8x8xf32>
    %135 = vector.broadcast %cst_55 : f32 to vector<8x8xf32>
    %136 = arith.select %133, %134, %135 : vector<8x8xi1>, vector<8x8xf32>
    %137 = arith.mulf %131, %136 : vector<8x8xf32>
    %138 = arith.addf %126, %137 : vector<8x8xf32>
    %139 = arith.addf %127, %136 : vector<8x8xf32>
    %c7_i32 = arith.constant 7 : i32
    %140 = arith.index_cast %c7_i32 : i32 to index
    %c0_56 = arith.constant 0 : index
    %141 = vector.load %arg7[%140, %c0_56] : memref<8x8xf32, #tpu.memory_space<vmem>>, vector<1x8xf32>
    %142 = vector.broadcast %141 : vector<1x8xf32> to vector<8x8xf32>
    %143 = arith.subf %53, %142 : vector<8x8xf32>
    %cst_57 = arith.constant 0.000000e+00 : f32
    %144 = vector.broadcast %cst_57 : f32 to vector<8x8xf32>
    %145 = arith.cmpf oge, %143, %144 : vector<8x8xf32>
    %cst_58 = arith.constant 1.000000e+00 : f32
    %cst_59 = arith.constant 0.000000e+00 : f32
    %146 = vector.broadcast %cst_58 : f32 to vector<8x8xf32>
    %147 = vector.broadcast %cst_59 : f32 to vector<8x8xf32>
    %148 = arith.select %145, %146, %147 : vector<8x8xi1>, vector<8x8xf32>
    %149 = arith.mulf %143, %148 : vector<8x8xf32>
    %150 = arith.addf %138, %149 : vector<8x8xf32>
    %151 = arith.addf %139, %148 : vector<8x8xf32>
    %c8_i32_60 = arith.constant 8 : i32
    %152 = vector.shape_cast %150 : vector<8x8xf32> to vector<1x8x8xf32>
    %cst_61 = arith.constant dense<0.000000e+00> : vector<1xf32>
    %153 = vector.multi_reduction <add>, %152, %cst_61 [1, 2] : vector<1x8x8xf32> to vector<1xf32>
    %154 = vector.shape_cast %153 : vector<1xf32> to vector<1x1x1xf32>
    %155 = vector.extract %154[0, 0, 0] : f32 from vector<1x1x1xf32>
    %156 = vector.broadcast %155 : f32 to vector<1x1xf32>
    %157 = arith.addf %48, %156 : vector<1x1xf32>
    %158 = vector.shape_cast %151 : vector<8x8xf32> to vector<1x8x8xf32>
    %cst_62 = arith.constant dense<0.000000e+00> : vector<1xf32>
    %159 = vector.multi_reduction <add>, %158, %cst_62 [1, 2] : vector<1x8x8xf32> to vector<1xf32>
    %160 = vector.shape_cast %159 : vector<1xf32> to vector<1x1x1xf32>
    %161 = vector.extract %160[0, 0, 0] : f32 from vector<1x1x1xf32>
    %162 = vector.broadcast %161 : f32 to vector<1x1xf32>
    %163 = arith.fptosi %162 : vector<1x1xf32> to vector<1x1xi32>
    %164 = arith.addi %49, %163 : vector<1x1xi32>
    %c1_i32_63 = arith.constant 1 : i32
    %165 = vector.shape_cast %157 : vector<1x1xf32> to vector<1x1x1xf32>
    %c0_64 = arith.constant 0 : index
    %c0_65 = arith.constant 0 : index
    %c0_66 = arith.constant 0 : index
    %166 = vector.load %arg4[%c0_64, %c0_65, %c0_66] : memref<1x1x1xf32, #tpu.memory_space<vmem>>, vector<1x1x1xf32>
    tpu.vector_store %arg4[%c0_64, %c0_65, %c0_66], %165 {strides = array<i32>} : memref<1x1x1xf32, #tpu.memory_space<vmem>>, vector<1x1x1xf32>,
    %167 = vector.shape_cast %164 : vector<1x1xi32> to vector<1x1x1xi32>
    %c0_67 = arith.constant 0 : index
    %c0_68 = arith.constant 0 : index
    %c0_69 = arith.constant 0 : index
    %168 = vector.load %arg5[%c0_67, %c0_68, %c0_69] : memref<1x1x1xi32, #tpu.memory_space<vmem>>, vector<1x1x1xi32>
    tpu.vector_store %arg5[%c0_67, %c0_68, %c0_69], %167 {strides = array<i32>} : memref<1x1x1xi32, #tpu.memory_space<vmem>>, vector<1x1x1xi32>,
    return
  }
  func.func @transform_0(%arg0: i32) -> (i32, i32) {
    %c0_i32 = arith.constant 0 : i32
    %c0_i32_0 = arith.constant 0 : i32
    %c0_i32_1 = arith.constant 0 : i32
    return %c0_i32, %c0_i32_0 : i32, i32
  }
  func.func @transform_1(%arg0: i32) -> (i32, i32) {
    %c0_i32 = arith.constant 0 : i32
    %c0_i32_0 = arith.constant 0 : i32
    return %c0_i32, %arg0 : i32, i32
  }
  func.func @transform_2(%arg0: i32) -> (i32, i32) {
    %c0_i32 = arith.constant 0 : i32
    %c0_i32_0 = arith.constant 0 : i32
    %c0_i32_1 = arith.constant 0 : i32
    return %c0_i32, %c0_i32_0 : i32, i32
  }
  func.func @transform_3(%arg0: i32) -> (i32, i32, i32) {
    %c0_i32 = arith.constant 0 : i32
    %c0_i32_0 = arith.constant 0 : i32
    %c0_i32_1 = arith.constant 0 : i32
    return %arg0, %c0_i32, %c0_i32_0 : i32, i32, i32
  }
  func.func @transform_4(%arg0: i32) -> (i32, i32, i32) {
    %c0_i32 = arith.constant 0 : i32
    %c0_i32_0 = arith.constant 0 : i32
    %c0_i32_1 = arith.constant 0 : i32
    return %arg0, %c0_i32, %c0_i32_0 : i32, i32, i32
  }
}

</mosaic_0001>

<llo_original>
// kernel: tpu_custom_call.1
$region0: #{tpu_custom_call.1}
  #allocation0 [shape = 'u32[]', space=smem, size = 0x4, offset = 0x4, fixed_abs, tag = 'smem constant byte address 0x4 - core index']
  #allocation1 [shape = 'u32[144,128]{1,0:T(1,128)}', space=vmem, size = 0x12000, scoped, tag = 'internal scratch']
  #allocation2 [shape = 'f32[8,8]{1,0:T(8,128)}', space=vmem, size = 0x1000, scoped, tag = 'scratch operand']
  #allocation3 [shape = 'f32[8,8]{1,0:T(8,128)}', space=vmem, size = 0x1000, scoped, tag = 'scratch operand']
  %s0 = inlined_call_operand.vmem [shape: f32[8,32], index: 0, kind: input, shape index: {}]
  %s1 = inlined_call_operand.vmem [shape: s32[1,8], index: 1, kind: input, shape index: {}]
  %s2 = inlined_call_operand.vmem [shape: s32[8,1], index: 2, kind: input, shape index: {}]
  %s3 = inlined_call_operand.hbm [shape: f32[1,1,1], index: 3, kind: output, shape index: {0}]
  %s4 = inlined_call_operand.hbm [shape: s32[1,1,1], index: 4, kind: output, shape index: {1}]
  %5 = xla_tuple %s3, %s4
  %s6 = sld [smem:[#allocation0]]
  $region30: #{tpu_custom_call.1} parent=0
    _
  %s8 = ssub.s32 1, %s6
  %s9 = scalar_select 0, %s8, %s6
  $region1: #{tpu_custom_call.1} parent=0
    #allocation4 [shape = 'u8[512]{0}', space=vmem, size = 0x400, scoped, tag = 'output window, operand 0, single buffered']
    #allocation5 [shape = 's32[1]{0}', space=sflag, size = 0x4, scoped, tag = 'scoped memory for tpu_custom_call.1']
    #allocation6 [shape = 'u8[512]{0}', space=vmem, size = 0x400, scoped, tag = 'output window, operand 1, single buffered']
    #allocation7 [shape = 's32[1]{0}', space=sflag, size = 0x4, scoped, tag = 'scoped memory for tpu_custom_call.1']
    %10 = vsyncpa [#allocation5], 0
    %11 = vsyncpa [#allocation7], 0
    // Predicated region
    $region2: #{tpu_custom_call.1} parent=1 // pred_check
      _
    $region3: #{tpu_custom_call.1} parent=1 // pred_check_branch
      %13 = sbr.rel (0) target = $region5
    $region4: #{tpu_custom_call.1} parent=1 // pred_region
      _
    $region5: #{tpu_custom_call.1} parent=1 // pred_fallthru
      _
    // Predicated region
    $region6: #{tpu_custom_call.1} parent=1 // pred_check
      _
    $region7: #{tpu_custom_call.1} parent=1 // pred_check_branch
      %15 = sbr.rel (0) target = $region9
    $region8: #{tpu_custom_call.1} parent=1 // pred_region
      _
    $region9: #{tpu_custom_call.1} parent=1 // pred_fallthru
      _
    // Predicated region
    $region10: #{tpu_custom_call.1} parent=1 // pred_check
      _
    $region11: #{tpu_custom_call.1} parent=1 // pred_check_branch
      %17 = sbr.rel (0) target = $region13
    $region12: #{tpu_custom_call.1} parent=1 // pred_region
      _
    $region13: #{tpu_custom_call.1} parent=1 // pred_fallthru
      _
    %s18 = smul.u32 0, 8
    %v19 = vld [vmem:[%s0] sm:$0xff]
    %s20 = scalar_lea.vmem %s0, %s18
    %v21 = vld [vmem:[%s20] sm:$0xff]
    %v22 = vmul.f32 %v19, %v19
    %vm23 = vcmask 261120
    %v24 = vsel %vm23, %v22, 0.0
    %25 = vadd.xlane.f32.xlu0 %v24
    %v26 = vpop.xlane.xlu0 %25
    %v27 = vmul.f32 %v21, %v21
    %v29 = vsel %vm23, 1.0, 0
    %v32 = vsel %vm23, %v27, 0
    %34 = vmatprep.subr.mxu0 0.0
    %35 = vmatpush1.xpose.msra.mxu0 0.0
    %36 = vmatprep.subr.mxu0 0.0
    %37 = vmatpush1.xpose.msra.mxu0 0.0
    %38 = vmatprep.subr.mxu0 0.0
    %39 = vmatpush1.xpose.msra.mxu0 0.0
    %40 = vmatprep.subr.mxu0 0.0
    %41 = vmatpush1.xpose.msra.mxu0 0.0
    %42 = vmatprep.subr.mxu0 0.0
    %43 = vmatpush1.xpose.msra.mxu0 0.0
    %44 = vmatprep.subr.mxu0 0.0
    %45 = vmatpush1.xpose.msra.mxu0 0.0
    %46 = vmatprep.subr.mxu0 0.0
    %47 = vmatpush1.xpose.msra.mxu0 0.0
    %48 = vmatprep.subr.mxu0 0.0
    %49 = vmatpush1.xpose.msra.mxu0 0.0
    %50 = vmatprep.subr.mxu0 0.0
    %51 = vmatpush1.xpose.msra.mxu0 0.0
    %52 = vmatprep.subr.mxu0 0.0
    %53 = vmatpush1.xpose.msra.mxu0 0.0
    %54 = vmatprep.subr.mxu0 0.0
    %55 = vmatpush1.xpose.msra.mxu0 0.0
    %56 = vmatprep.subr.mxu0 0.0
    %57 = vmatpush1.xpose.msra.mxu0 0.0
    %58 = vmatprep.subr.mxu0 0.0
    %59 = vmatpush1.xpose.msra.mxu0 0.0
    %60 = vmatprep.subr.mxu0 0.0
    %61 = vmatpush1.xpose.msra.mxu0 0.0
    %62 = vmatprep.subr.mxu0 0.0
    %63 = vmatpush1.xpose.msra.mxu0 0.0
    %64 = vmatprep.subr.mxu0 0.0
    %65 = vmatpush1.xpose.msra.mxu0 %v32
    %66 = vmatprep.subr.mxu0 0.0
    %67 = vmatpush2.xpose.msra.mxu0 0.0
    %68 = vmatprep.subr.mxu0 0.0
    %69 = vmatpush2.xpose.msra.mxu0 0.0
    %70 = vmatprep.subr.mxu0 0.0
    %71 = vmatpush2.xpose.msra.mxu0 0.0
    %72 = vmatprep.subr.mxu0 0.0
    %73 = vmatpush2.xpose.msra.mxu0 0.0
    %74 = vmatprep.subr.mxu0 0.0
    %75 = vmatpush2.xpose.msra.mxu0 0.0
    %76 = vmatprep.subr.mxu0 0.0
    %77 = vmatpush2.xpose.msra.mxu0 0.0
    %78 = vmatprep.subr.mxu0 0.0
    %79 = vmatpush2.xpose.msra.mxu0 0.0
    %80 = vmatprep.subr.mxu0 0.0
    %81 = vmatpush2.xpose.msra.mxu0 0.0
    %82 = vmatprep.subr.mxu0 0.0
    %83 = vmatpush2.xpose.msra.mxu0 0.0
    %84 = vmatprep.subr.mxu0 0.0
    %85 = vmatpush2.xpose.msra.mxu0 0.0
    %86 = vmatprep.subr.mxu0 0.0
    %87 = vmatpush2.xpose.msra.mxu0 0.0
    %88 = vmatprep.subr.mxu0 0.0
    %89 = vmatpush2.xpose.msra.mxu0 0.0
    %90 = vmatprep.subr.mxu0 0.0
    %91 = vmatpush2.xpose.msra.mxu0 0.0
    %92 = vmatprep.subr.mxu0 0.0
    %93 = vmatpush2.xpose.msra.mxu0 0.0
    %94 = vmatprep.subr.mxu0 0.0
    %95 = vmatpush2.xpose.msra.mxu0 0.0
    %96 = vmatprep.subr.mxu0 0.0
    %97 = vmatpush2.xpose.msra.mxu0 0.0
    %98 = vmatprep.mubr.f32.mxu0 0.0
    %99 = vmatmul.mubr.f32.gmra.mxu0 %v29
    %v100 = vpop.f32.mrf.mxu0
    %v101 = vadd.f32 0.0, %v100
    %v102 = vpop.f32.mrf.mxu0
    %103 = vdwg.mxu0
    %v105 = vsel %vm23, %v19, 0
    %v108 = vsel %vm23, %v21, 0
    %110 = vmatprep.subr.mxu0 0.0
    %111 = vmatpush1.xpose.msra.mxu0 0.0
    %112 = vmatprep.subr.mxu0 0.0
    %113 = vmatpush1.xpose.msra.mxu0 0.0
    %114 = vmatprep.subr.mxu0 0.0
    %115 = vmatpush1.xpose.msra.mxu0 0.0
    %116 = vmatprep.subr.mxu0 0.0
    %117 = vmatpush1.xpose.msra.mxu0 0.0
    %118 = vmatprep.subr.mxu0 0.0
    %119 = vmatpush1.xpose.msra.mxu0 0.0
    %120 = vmatprep.subr.mxu0 0.0
    %121 = vmatpush1.xpose.msra.mxu0 0.0
    %122 = vmatprep.subr.mxu0 0.0
    %123 = vmatpush1.xpose.msra.mxu0 0.0
    %124 = vmatprep.subr.mxu0 0.0
    %125 = vmatpush1.xpose.msra.mxu0 0.0
    %126 = vmatprep.subr.mxu0 0.0
    %127 = vmatpush1.xpose.msra.mxu0 0.0
    %128 = vmatprep.subr.mxu0 0.0
    %129 = vmatpush1.xpose.msra.mxu0 0.0
    %130 = vmatprep.subr.mxu0 0.0
    %131 = vmatpush1.xpose.msra.mxu0 0.0
    %132 = vmatprep.subr.mxu0 0.0
    %133 = vmatpush1.xpose.msra.mxu0 0.0
    %134 = vmatprep.subr.mxu0 0.0
    %135 = vmatpush1.xpose.msra.mxu0 0.0
    %136 = vmatprep.subr.mxu0 0.0
    %137 = vmatpush1.xpose.msra.mxu0 0.0
    %138 = vmatprep.subr.mxu0 0.0
    %139 = vmatpush1.xpose.msra.mxu0 0.0
    %140 = vmatprep.subr.mxu0 0.0
    %141 = vmatpush1.xpose.msra.mxu0 %v108
    %142 = vmatprep.subr.mxu0 0.0
    %143 = vmatpush2.xpose.msra.mxu0 0.0
    %144 = vmatprep.subr.mxu0 0.0
    %145 = vmatpush2.xpose.msra.mxu0 0.0
    %146 = vmatprep.subr.mxu0 0.0
    %147 = vmatpush2.xpose.msra.mxu0 0.0
    %148 = vmatprep.subr.mxu0 0.0
    %149 = vmatpush2.xpose.msra.mxu0 0.0
    %150 = vmatprep.subr.mxu0 0.0
    %151 = vmatpush2.xpose.msra.mxu0 0.0
    %152 = vmatprep.subr.mxu0 0.0
    %153 = vmatpush2.xpose.msra.mxu0 0.0
    %154 = vmatprep.subr.mxu0 0.0
    %155 = vmatpush2.xpose.msra.mxu0 0.0
    %156 = vmatprep.subr.mxu0 0.0
    %157 = vmatpush2.xpose.msra.mxu0 0.0
    %158 = vmatprep.subr.mxu0 0.0
    %159 = vmatpush2.xpose.msra.mxu0 0.0
    %160 = vmatprep.subr.mxu0 0.0
    %161 = vmatpush2.xpose.msra.mxu0 0.0
    %162 = vmatprep.subr.mxu0 0.0
    %163 = vmatpush2.xpose.msra.mxu0 0.0
    %164 = vmatprep.subr.mxu0 0.0
    %165 = vmatpush2.xpose.msra.mxu0 0.0
    %166 = vmatprep.subr.mxu0 0.0
    %167 = vmatpush2.xpose.msra.mxu0 0.0
    %168 = vmatprep.subr.mxu0 0.0
    %169 = vmatpush2.xpose.msra.mxu0 0.0
    %170 = vmatprep.subr.mxu0 0.0
    %171 = vmatpush2.xpose.msra.mxu0 0.0
    %172 = vmatprep.subr.mxu0 0.0
    %173 = vmatpush2.xpose.msra.mxu0 0.0
    %174 = vmatprep.mubr.f32.mxu0 0.0
    %175 = vmatmul.mubr.f32.gmra.mxu0 %v105
    %v176 = vpop.f32.mrf.mxu0
    %v177 = vadd.f32 0.0, %v176
    %v178 = vpop.f32.mrf.mxu0
    %179 = vdwg.mxu0
    %v180 = vlaneseq
    %v181 = vshrl.u32 %v180, 7
    %v182 = vsub.s32 0, %v181
    %v183 = vrot.slane %v101, %v182
    %v184 = vadd.f32 %v26, %v183
    %v185 = vmul.f32 %v177, 2.0
    %v186 = vsub.f32 %v184, %v185
    %v187 = vmax.f32 %v186, 0.0
    %v188 = vrsqrt.pop %v187
    %v189 = vmul.f32 %v187, %v188
    %vm190 = vcmp.eq.f32.partialorder %v187, inf
    %v191 = vsel %vm190, %v187, %v189
    %vm192 = vcmp.eq.f32.partialorder %v187, 0.0
    %v193 = vand.u32 %v187, 2147483648
    %v194 = vsel %vm192, %v193, %v191
    %v195 = vld [vmem:[%s1] sm:$0x1]
    %v196 = vld [vmem:[%s2] sm:$0xff]
    %197 = vset.pattern.permute.xlu0 0
    %198 = vperm.xlu0 %197, %v196
    %v199 = vpop.permute.xlu0 %198
    %v200 = vlaneseq
    %v201 = vshrl.u32 %v200, 7
    %v202 = vsub.s32 0, %v201
    %v203 = vrot.slane %v195, %v202
    %vm204 = vcmp.eq.s32.totalorder %v199, %v203
    %v205 = vlaneseq
    %v206 = vshrl.u32 %v205, 7
    %v207 = vlaneseq
    %v208 = vand.u32 %v207, 127
    %v209 = vstv %s18
    %v210 = vadd.s32 %v209, %v208
    %vm211 = vcmp.lt.s32.totalorder %v206, 8
    %vm212 = vcmp.lt.s32.totalorder %v210, 8
    %vm213 = vcmp.ne.s32.totalorder %v206, %v210
    %vm214 = vmand %vm204, %vm213
    %vm215 = vmand %vm214, %vm211
    %vm216 = vmand %vm215, %vm212
    %vm217 = vmxor %vm204, 1
    %vm218 = vmand %vm217, %vm211
    %v219 = vadd.f32 %v194, 0.2
    %v220 = vsel %vm216, %v219, -1e+30
    %vm221 = vcmask 64512
    %222 = vst.msk [vmem:[#allocation2] sm:$0xff] %vm221, %v220
    %v223 = vsel %vm218, %v194, 1e+30
    %224 = vst.msk [vmem:[#allocation3] sm:$0xff] %vm221, %v223
    %v225 = vld [vmem:[#allocation2] sm:$0xff]
    %v226 = vld [vmem:[#allocation3] sm:$0x1]
    %v227 = vlaneseq
    %v228 = vshrl.u32 %v227, 7
    %v229 = vsub.s32 0, %v228
    %v230 = vrot.slane %v226, %v229
    %v231 = vsub.f32 %v225, %v230
    %vm232 = vcmp.ge.f32.partialorder %v231, 0.0
    %v233 = vsel %vm232, 1.0, 0.0
    %v234 = vmul.f32 %v231, %v233
    %v235 = vadd.f32 %v234, 0.0
    %v236 = vadd.f32 %v233, 0.0
    %v237 = vld [vmem:[#allocation3 + $0x1] sm:$0x1]
    %v238 = vlaneseq
    %v239 = vshrl.u32 %v238, 7
    %v240 = vsub.s32 0, %v239
    %v241 = vrot.slane %v237, %v240
    %v242 = vsub.f32 %v225, %v241
    %vm243 = vcmp.ge.f32.partialorder %v242, 0.0
    %v244 = vsel %vm243, 1.0, 0.0
    %v245 = vmul.f32 %v242, %v244
    %v246 = vadd.f32 %v235, %v245
    %v247 = vadd.f32 %v236, %v244
    %v248 = vld [vmem:[#allocation3 + $0x2] sm:$0x1]
    %v249 = vlaneseq
    %v250 = vshrl.u32 %v249, 7
    %v251 = vsub.s32 0, %v250
    %v252 = vrot.slane %v248, %v251
    %v253 = vsub.f32 %v225, %v252
    %vm254 = vcmp.ge.f32.partialorder %v253, 0.0
    %v255 = vsel %vm254, 1.0, 0.0
    %v256 = vmul.f32 %v253, %v255
    %v257 = vadd.f32 %v246, %v256
    %v258 = vadd.f32 %v247, %v255
    %v259 = vld [vmem:[#allocation3 + $0x3] sm:$0x1]
    %v260 = vlaneseq
    %v261 = vshrl.u32 %v260, 7
    %v262 = vsub.s32 0, %v261
    %v263 = vrot.slane %v259, %v262
    %v264 = vsub.f32 %v225, %v263
    %vm265 = vcmp.ge.f32.partialorder %v264, 0.0
    %v266 = vsel %vm265, 1.0, 0.0
    %v267 = vmul.f32 %v264, %v266
    %v268 = vadd.f32 %v257, %v267
    %v269 = vadd.f32 %v258, %v266
    %v270 = vld [vmem:[#allocation3 + $0x4] sm:$0x1]
    %v271 = vlaneseq
    %v272 = vshrl.u32 %v271, 7
    %v273 = vsub.s32 0, %v272
    %v274 = vrot.slane %v270, %v273
    %v275 = vsub.f32 %v225, %v274
    %vm276 = vcmp.ge.f32.partialorder %v275, 0.0
    %v277 = vsel %vm276, 1.0, 0.0
    %v278 = vmul.f32 %v275, %v277
    %v279 = vadd.f32 %v268, %v278
    %v280 = vadd.f32 %v269, %v277
    %v281 = vld [vmem:[#allocation3 + $0x5] sm:$0x1]
    %v282 = vlaneseq
    %v283 = vshrl.u32 %v282, 7
    %v284 = vsub.s32 0, %v283
    %v285 = vrot.slane %v281, %v284
    %v286 = vsub.f32 %v225, %v285
    %vm287 = vcmp.ge.f32.partialorder %v286, 0.0
    %v288 = vsel %vm287, 1.0, 0.0
    %v289 = vmul.f32 %v286, %v288
    %v290 = vadd.f32 %v279, %v289
    %v291 = vadd.f32 %v280, %v288
    %v292 = vld [vmem:[#allocation3 + $0x6] sm:$0x1]
    %v293 = vlaneseq
    %v294 = vshrl.u32 %v293, 7
    %v295 = vsub.s32 0, %v294
    %v296 = vrot.slane %v292, %v295
    %v297 = vsub.f32 %v225, %v296
    %vm298 = vcmp.ge.f32.partialorder %v297, 0.0
    %v299 = vsel %vm298, 1.0, 0.0
    %v300 = vmul.f32 %v297, %v299
    %v301 = vadd.f32 %v290, %v300
    %v302 = vadd.f32 %v291, %v299
    %v303 = vld [vmem:[#allocation3 + $0x7] sm:$0x1]
    %v304 = vlaneseq
    %v305 = vshrl.u32 %v304, 7
    %v306 = vsub.s32 0, %v305
    %v307 = vrot.slane %v303, %v306
    %v308 = vsub.f32 %v225, %v307
    %vm309 = vcmp.ge.f32.partialorder %v308, 0.0
    %v310 = vsel %vm309, 1.0, 0.0
    %v311 = vmul.f32 %v308, %v310
    %v312 = vadd.f32 %v301, %v311
    %v313 = vadd.f32 %v302, %v310
    %v314 = vsel %vm221, %v312, 0.0
    %315 = vadd.xlane.f32.xlu0 %v314
    %v316 = vpop.xlane.xlu0 %315
    %v317 = vrot.slane %v316, 4
    %v318 = vadd.f32 %v316, %v317
    %v319 = vrot.slane %v318, 2
    %v320 = vadd.f32 %v318, %v319
    %v321 = vrot.slane %v320, 1
    %v322 = vadd.f32 %v320, %v321
    %s323 = vtos %v322
    %v324 = vstv %s323
    %v325 = vadd.f32 %v324, 0.0
    %v326 = vsel %vm221, %v313, 0.0
    %327 = vadd.xlane.f32.xlu0 %v326
    %v328 = vpop.xlane.xlu0 %327
    %v329 = vrot.slane %v328, 4
    %v330 = vadd.f32 %v328, %v329
    %v331 = vrot.slane %v330, 2
    %v332 = vadd.f32 %v330, %v331
    %v333 = vrot.slane %v332, 1
    %v334 = vadd.f32 %v332, %v333
    %s335 = vtos %v334
    %v336 = vstv %s335
    %v337 = vcvt.f32.s32.to.zero.pseudo %v336
    %vm338 = vcmask 0
    %339 = vst.msk [vmem:[#allocation4] sm:$0x1] %vm338, %v325
    %340 = vst.msk [vmem:[#allocation6] sm:$0x1] %vm338, %v337
    // Predicated region
    $region14: #{tpu_custom_call.1} parent=1 // pred_check
      _
    $region15: #{tpu_custom_call.1} parent=1 // pred_check_branch
      %342 = sbr.rel (0) target = $region17
    $region16: #{tpu_custom_call.1} parent=1 // pred_region
      %s344 = ssub.s32 16, 16
      %345 = vsyncadd [#allocation5], %s344
      %s347 = sshll.u32 [#allocation4], 4
      %s348 = int_to_ptr.vmem [resolvable:$true] %s347
      %350 = dma.vmem_to_hbm [thread:$0]  %s348, 16, %s3, [#allocation5]
    $region17: #{tpu_custom_call.1} parent=1 // pred_fallthru
      _
    // Predicated region
    $region18: #{tpu_custom_call.1} parent=1 // pred_check
      _
    $region19: #{tpu_custom_call.1} parent=1 // pred_check_branch
      %352 = sbr.rel (0) target = $region21
    $region20: #{tpu_custom_call.1} parent=1 // pred_region
      %s354 = ssub.s32 16, 16
      %355 = vsyncadd [#allocation7], %s354
      %s357 = sshll.u32 [#allocation6], 4
      %s358 = int_to_ptr.vmem [resolvable:$true] %s357
      %360 = dma.vmem_to_hbm [thread:$0]  %s358, 16, %s4, [#allocation7]
    $region21: #{tpu_custom_call.1} parent=1 // pred_fallthru
      _
    // Predicated region
    $region22: #{tpu_custom_call.1} parent=1 // pred_check
      _
    $region23: #{tpu_custom_call.1} parent=1 // pred_check_branch
      %362 = sbr.rel (0) target = $region25
    $region24: #{tpu_custom_call.1} parent=1 // pred_region
      %363 = dma.done [#allocation5], 16
    $region25: #{tpu_custom_call.1} parent=1 // pred_fallthru
      _
    // Predicated region
    $region26: #{tpu_custom_call.1} parent=1 // pred_check
      _
    $region27: #{tpu_custom_call.1} parent=1 // pred_check_branch
      %365 = sbr.rel (0) target = $region29
    $region28: #{tpu_custom_call.1} parent=1 // pred_region
      %366 = dma.done [#allocation7], 16
    $region29: #{tpu_custom_call.1} parent=1 // pred_fallthru
      _
    %367 = vsyncpa [#allocation5], 1
    %368 = vsyncpa [#allocation7], 1

</llo_original>
